<compile_context>
chip_gen: v6e
topology: v6e:2x2x1
jax: 0.10.0
libtpu: 0.0.40
codegen_flags: <defaults>
</compile_context>

<pallas_src>
import functools
import math

import jax
import jax.numpy as jnp
from jax import lax
from jax.experimental import pallas as pl
from jax.experimental.pallas import tpu as pltpu


def _round_up(x, m):
    return (x + m - 1) // m * m


def _cdiv(a, b):
    return (a + b - 1) // b


_INV_SQRT2 = 1.0 / math.sqrt(2.0)
_SQRT_2_OVER_PI = math.sqrt(2.0 / math.pi)


def _gelu_exact(g):
    # PyTorch F.gelu default (exact, erf-based); kept for parity with the module.
    return 0.5 * g * (1.0 + lax.erf(g * _INV_SQRT2))


def _gelu_tanh(g):
    # Optional tanh approximation (EUP path on v6e/v7x); slight numerics change.
    return 0.5 * g * (1.0 + jnp.tanh(_SQRT_2_OVER_PI * (g + 0.044715 * g * g * g)))


def _geglu_kernel(x_ref, w_ref, bv_ref, bg_ref, o_ref, acc_ref, *,
                  tk, resident, compute_dtype, gelu_fn):
    k = pl.program_id(2)

    @pl.when(k == 0)
    def _():
        acc_ref[...] = jnp.zeros_like(acc_ref)

    x_blk = x_ref[...]
    if x_blk.dtype != compute_dtype:
        x_blk = x_blk.astype(compute_dtype)      # cast folded into the kernel (no HBM copy)

    if resident:
        # Full-K fused weight slab is VMEM-resident per N tile; slice this K chunk in-register.
        row = pl.multiple_of(k * tk, tk)
        w_blk = w_ref[pl.ds(row, tk), :]
    else:
        w_blk = w_ref[...]

    # Fused projection: weight columns are [value_j | gate_j] -> one MXU matmul per (M,N,K).
    acc_ref[...] += jnp.dot(x_blk, w_blk, preferred_element_type=jnp.float32)

    @pl.when(k == pl.num_programs(2) - 1)
    def _():
        tn = o_ref.shape[1]
        a = acc_ref[:, :tn] + bv_ref[...]        # value half (f32)
        g = acc_ref[:, tn:] + bg_ref[...]        # gate half  (f32)
        o_ref[...] = (a * gelu_fn(g)).astype(o_ref.dtype)


def make_geglu(w, b, *, tm=512, tn=512, tk=512,
               compute_dtype=jnp.bfloat16, out_dtype=None,
               gelu_approx=False,
               weight_vmem_budget_bytes=24 * 1024 * 1024):
    """GEGLU with PyTorch nn.Linear params.

    w: [2*dim_out, dim_in] (PyTorch Linear layout), b: [2*dim_out].
    Weight prep (transpose / interleave / cast) happens here, once, at "init time".
    Returns apply(x) for x of shape [..., dim_in] -> [..., dim_out].
    """
    two_dout, dim_in = w.shape
    dim_out = two_dout // 2

    # ---- tiling over N (dim_out) and K (dim_in) ----
    tn_eff = min(tn, dim_out)
    dim_out_pad = _round_up(dim_out, tn_eff)
    n_n = dim_out_pad // tn_eff

    tk_eff = dim_in if dim_in <= tk else tk
    dim_in_pad = _round_up(dim_in, tk_eff)
    n_k = dim_in_pad // tk_eff

    w_itemsize = jnp.dtype(compute_dtype).itemsize
    # Weight-resident schedule if the double-buffered full-K slab fits the VMEM budget.
    resident = 2 * dim_in_pad * 2 * tn_eff * w_itemsize <= weight_vmem_budget_bytes

    # ---- one-time parameter prep (no per-call weight work) ----
    wv = jnp.transpose(w[:dim_out, :])      # [dim_in, dim_out]  value half
    wg = jnp.transpose(w[dim_out:, :])      # [dim_in, dim_out]  gate half
    bv = b[:dim_out].astype(jnp.float32)
    bg = b[dim_out:].astype(jnp.float32)

    if dim_out_pad != dim_out:
        pad_n = dim_out_pad - dim_out
        wv = jnp.pad(wv, ((0, 0), (0, pad_n)))
        wg = jnp.pad(wg, ((0, 0), (0, pad_n)))
        bv = jnp.pad(bv, (0, pad_n))
        bg = jnp.pad(bg, (0, pad_n))
    if dim_in_pad != dim_in:
        pad_k = dim_in_pad - dim_in
        wv = jnp.pad(wv, ((0, pad_k), (0, 0)))
        wg = jnp.pad(wg, ((0, pad_k), (0, 0)))

    # Column block j of wf == [value cols of N tile j | gate cols of N tile j].
    wf = jnp.stack([wv.reshape(dim_in_pad, n_n, tn_eff),
                    wg.reshape(dim_in_pad, n_n, tn_eff)], axis=2)
    wf = wf.reshape(dim_in_pad, 2 * dim_out_pad).astype(compute_dtype)
    bv = bv.reshape(1, dim_out_pad)          # f32 per-half biases (no lane slicing in kernel)
    bg = bg.reshape(1, dim_out_pad)
    # TODO(synk): optional fp8 weight quantization for v7x (per-column scales folded into the
    # epilogue) is not implemented; bf16 weights are used on all generations.

    gelu_fn = _gelu_tanh if gelu_approx else _gelu_exact
    kernel = functools.partial(_geglu_kernel, tk=tk_eff, resident=resident,
                               compute_dtype=jnp.dtype(compute_dtype), gelu_fn=gelu_fn)

    def apply(x):
        out_dt = out_dtype if out_dtype is not None else x.dtype
        lead = x.shape[:-1]
        x2 = x.reshape(-1, x.shape[-1])
        m = x2.shape[0]

        # Only pad K if dim_in is not a tile multiple (rare at production sizes).
        # M is never padded: the ragged last M block is handled by Pallas block clamping,
        # and the cast to compute_dtype happens inside the kernel -> no extra HBM pass over x.
        if dim_in_pad != dim_in:
            x2 = jnp.pad(x2, ((0, 0), (0, dim_in_pad - dim_in)))

        tm_eff = min(tm, _round_up(m, 8))
        n_m = _cdiv(m, tm_eff)
        # v7x megacore guard: keep at least 2 parallel programs so both TensorCores get work.
        if n_m * n_n < 2 and m > 8:
            tm_eff = max(8, _round_up(_cdiv(m, 2), 8))
            n_m = _cdiv(m, tm_eff)

        # VMEM limit derived from the actual tile footprint (double-buffered ins/outs + acc).
        w_rows = dim_in_pad if resident else tk_eff
        vmem_bytes = (2 * tm_eff * tk_eff * x2.dtype.itemsize
                      + 2 * w_rows * 2 * tn_eff * w_itemsize
                      + 2 * 2 * tn_eff * 4
                      + 2 * tm_eff * tn_eff * jnp.dtype(out_dt).itemsize
                      + tm_eff * 2 * tn_eff * 4)
        vmem_limit = min(64 * 1024 * 1024,
                         max(16 * 1024 * 1024, int(vmem_bytes * 1.4) + (2 << 20)))

        cost = pl.CostEstimate(
            flops=4 * m * dim_in * dim_out,
            transcendentals=m * dim_out,
            bytes_accessed=int(n_n * m * dim_in_pad * x2.dtype.itemsize
                               + (1 if resident else n_m) * wf.size * w_itemsize
                               + (bv.size + bg.size) * 4
                               + m * dim_out_pad * jnp.dtype(out_dt).itemsize),
        )

        if resident:
            # j outermost: weight slab block index only changes with j -> W streamed once.
            grid = (n_n, n_m, n_k)
            x_spec = pl.BlockSpec((tm_eff, tk_eff), lambda j, i, k: (i, k))
            w_spec = pl.BlockSpec((dim_in_pad, 2 * tn_eff), lambda j, i, k: (0, j))
            bv_spec = pl.BlockSpec((1, tn_eff), lambda j, i, k: (0, j))
            bg_spec = pl.BlockSpec((1, tn_eff), lambda j, i, k: (0, j))
            o_spec = pl.BlockSpec((tm_eff, tn_eff), lambda j, i, k: (i, j))
        else:
            grid = (n_m, n_n, n_k)
            x_spec = pl.BlockSpec((tm_eff, tk_eff), lambda i, j, k: (i, k))
            w_spec = pl.BlockSpec((tk_eff, 2 * tn_eff), lambda i, j, k: (k, j))
            bv_spec = pl.BlockSpec((1, tn_eff), lambda i, j, k: (0, j))
            bg_spec = pl.BlockSpec((1, tn_eff), lambda i, j, k: (0, j))
            o_spec = pl.BlockSpec((tm_eff, tn_eff), lambda i, j, k: (i, j))

        out = pl.pallas_call(
            kernel,
            out_shape=jax.ShapeDtypeStruct((m, dim_out_pad), out_dt),
            grid_spec=pltpu.PrefetchScalarGridSpec(
                num_scalar_prefetch=0,
                grid=grid,
                in_specs=[x_spec, w_spec, bv_spec, bg_spec],
                out_specs=o_spec,
                scratch_shapes=[pltpu.VMEM((tm_eff, 2 * tn_eff), jnp.float32)],
            ),
            compiler_params=pltpu.CompilerParams(
                dimension_semantics=("parallel", "parallel", "arbitrary"),
                vmem_limit_bytes=vmem_limit,
            ),
            cost_estimate=cost,
        )(x2, wf, bv, bg)

        if dim_out_pad != dim_out:
            out = out[:, :dim_out]
        return out.reshape(*lead, dim_out)

    return apply


def _ref_geglu(x, w, b, cast_dtype=None):
    """Pure-JAX reference. cast_dtype=bf16 mimics the kernel's compute precision."""
    dim_out = w.shape[0] // 2
    wv = jnp.transpose(w[:dim_out, :])
    wg = jnp.transpose(w[dim_out:, :])
    xc = x
    if cast_dtype is not None:
        xc, wv, wg = xc.astype(cast_dtype), wv.astype(cast_dtype), wg.astype(cast_dtype)
    a = jnp.dot(xc, wv, preferred_element_type=jnp.float32) + b[:dim_out]
    g = jnp.dot(xc, wg, preferred_element_type=jnp.float32) + b[dim_out:]
    return a * _gelu_exact(g)


if __name__ == "__main__":
    key = jax.random.PRNGKey(0)
    k_x, k_w, k_b, k_x2, k_w2, k_b2 = jax.random.split(key, 6)

    # ---- test 1: module-sized shapes (batch=2, seq=8, dim_in=32, dim_out=32) ----
    batch, seq, dim_in, dim_out = 2, 8, 32, 32
    bound = 1.0 / math.sqrt(dim_in)
    w = jax.random.uniform(k_w, (2 * dim_out, dim_in), jnp.float32, -bound, bound)
    b = jax.random.uniform(k_b, (2 * dim_out,), jnp.float32, -bound, bound)
    x = jax.random.normal(k_x, (batch, seq, dim_in), jnp.float32)

    geglu1 = make_geglu(w, b)                        # defaults (clamped to problem size)
    out1 = geglu1(x)
    jax.block_until_ready(out1)
    assert out1.shape == (batch, seq, dim_out)
    ref1_same = _ref_geglu(x, w, b, cast_dtype=jnp.bfloat16)   # same compute precision as kernel
    ref1_full = _ref_geglu(x, w, b)                            # exact f32 PyTorch semantics
    assert jnp.allclose(out1.astype(jnp.float32), ref1_same, atol=2e-3, rtol=2e-3), "test1 precise mismatch"
    assert jnp.allclose(out1.astype(jnp.float32), ref1_full, atol=5e-2, rtol=5e-2), "test1 mismatch vs f32 ref"

    # ---- test 2: ragged M + multi-tile N/K (padding-free ragged M, K-pad, resident weights) ----
    batch2, seq2, dim_in2, dim_out2 = 3, 50, 192, 256
    bound2 = 1.0 / math.sqrt(dim_in2)
    w2 = jax.random.uniform(k_w2, (2 * dim_out2, dim_in2), jnp.float32, -bound2, bound2)
    b2 = jax.random.uniform(k_b2, (2 * dim_out2,), jnp.float32, -bound2, bound2)
    x2 = jax.random.normal(k_x2, (batch2, seq2, dim_in2), jnp.float32)

    geglu2 = make_geglu(w2, b2, tm=64, tn=128, tk=128)   # grid (2, 3, 2), resident weights
    out2 = geglu2(x2)
    jax.block_until_ready(out2)
    assert out2.shape == (batch2, seq2, dim_out2)
    ref2_same = _ref_geglu(x2, w2, b2, cast_dtype=jnp.bfloat16)
    ref2_full = _ref_geglu(x2, w2, b2)
    assert jnp.allclose(out2.astype(jnp.float32), ref2_same, atol=2e-3, rtol=2e-3), "test2 precise mismatch"
    assert jnp.allclose(out2.astype(jnp.float32), ref2_full, atol=5e-2, rtol=5e-2), "test2 mismatch vs f32 ref"

    print("KERNEL_OK")
</pallas_src>

<mosaic_0001>
module attributes {stable_mosaic.version = 11 : i64} {
  func.func @_geglu_kernel(%arg0: i32, %arg1: i32, %arg2: i32, %arg3: memref<8x32xf32, #tpu.memory_space<vmem>>, %arg4: memref<32x64xbf16, #tpu.memory_space<vmem>>, %arg5: memref<1x32xf32, #tpu.memory_space<vmem>>, %arg6: memref<1x32xf32, #tpu.memory_space<vmem>>, %arg7: memref<8x32xf32, #tpu.memory_space<vmem>>, %arg8: memref<8x64xf32, #tpu.memory_space<vmem>>) attributes {dimension_semantics = [#tpu.dimension_semantics<parallel>, #tpu.dimension_semantics<parallel>, #tpu.dimension_semantics<arbitrary>], iteration_bounds = array<i64: 1, 2, 1>, scalar_prefetch = 0 : i64, scratch_operands = 1 : i64, tpu.core_type = #tpu.core_type<tc>, window_params = [{transform_indices = @transform_0, window_bounds = array<i64: 8, 32>}, {transform_indices = @transform_1, window_bounds = array<i64: 32, 64>}, {transform_indices = @transform_2, window_bounds = array<i64: 1, 32>}, {transform_indices = @transform_3, window_bounds = array<i64: 1, 32>}, {transform_indices = @transform_4, window_bounds = array<i64: 8, 32>}]} {
    %c0_i32 = arith.constant 0 : i32
    %0 = arith.cmpi eq, %arg2, %c0_i32 : i32
    %1 = arith.extui %0 : i1 to i32
    %c0_i32_0 = arith.constant 0 : i32
    %2 = arith.cmpi ne, %1, %c0_i32_0 : i32
    scf.if %2 {
      %cst_9 = arith.constant 0.000000e+00 : f32
      %16 = vector.broadcast %cst_9 : f32 to vector<8x64xf32>
      %c0_10 = arith.constant 0 : index
      %c0_11 = arith.constant 0 : index
      %17 = vector.load %arg8[%c0_10, %c0_11] : memref<8x64xf32, #tpu.memory_space<vmem>>, vector<8x64xf32>
      tpu.vector_store %arg8[%c0_10, %c0_11], %16 {strides = array<i32>} : memref<8x64xf32, #tpu.memory_space<vmem>>, vector<8x64xf32>,
    } else {
    }
    %c0 = arith.constant 0 : index
    %c0_1 = arith.constant 0 : index
    %3 = vector.load %arg3[%c0, %c0_1] : memref<8x32xf32, #tpu.memory_space<vmem>>, vector<8x32xf32>
    %4 = arith.truncf %3 : vector<8x32xf32> to vector<8x32xbf16>
    %c32_i32 = arith.constant 32 : i32
    %5 = arith.muli %arg2, %c32_i32 : i32
    %6 = tpu.assume_multiple %5, 32 : i32
    %7 = arith.index_cast %6 : i32 to index
    %c0_2 = arith.constant 0 : index
    %8 = vector.load %arg4[%7, %c0_2] : memref<32x64xbf16, #tpu.memory_space<vmem>>, vector<32x64xbf16>
    %c0_3 = arith.constant 0 : index
    %c0_4 = arith.constant 0 : index
    %9 = vector.load %arg8[%c0_3, %c0_4] : memref<8x64xf32, #tpu.memory_space<vmem>>, vector<8x64xf32>
    %cst = arith.constant dense<0.000000e+00> : vector<8x64xf32>
    %10 = tpu.matmul %4, %8, %cst {dimension_numbers = #tpu.dot_dimension_numbers<[1], [0], [0], [1], [0, 0, 1, 1], [], []>} : vector<8x32xbf16>, vector<32x64xbf16>, vector<8x64xf32> -> vector<8x64xf32>
    %11 = arith.addf %9, %10 : vector<8x64xf32>
    %c0_5 = arith.constant 0 : index
    %c0_6 = arith.constant 0 : index
    %12 = vector.load %arg8[%c0_5, %c0_6] : memref<8x64xf32, #tpu.memory_space<vmem>>, vector<8x64xf32>
    tpu.vector_store %arg8[%c0_5, %c0_6], %11 {strides = array<i32>} : memref<8x64xf32, #tpu.memory_space<vmem>>, vector<8x64xf32>,
    %c0_i32_7 = arith.constant 0 : i32
    %13 = arith.cmpi eq, %arg2, %c0_i32_7 : i32
    %14 = arith.extui %13 : i1 to i32
    %c0_i32_8 = arith.constant 0 : i32
    %15 = arith.cmpi ne, %14, %c0_i32_8 : i32
    scf.if %15 {
      %c0_9 = arith.constant 0 : index
      %c0_10 = arith.constant 0 : index
      %16 = vector.load %arg8[%c0_9, %c0_10] : memref<8x64xf32, #tpu.memory_space<vmem>>, vector<8x32xf32>
      %c0_11 = arith.constant 0 : index
      %c0_12 = arith.constant 0 : index
      %17 = vector.load %arg5[%c0_11, %c0_12] : memref<1x32xf32, #tpu.memory_space<vmem>>, vector<1x32xf32>
      %18 = vector.broadcast %17 : vector<1x32xf32> to vector<8x32xf32>
      %19 = arith.addf %16, %18 : vector<8x32xf32>
      %c0_13 = arith.constant 0 : index
      %c32 = arith.constant 32 : index
      %20 = vector.load %arg8[%c0_13, %c32] : memref<8x64xf32, #tpu.memory_space<vmem>>, vector<8x32xf32>
      %c0_14 = arith.constant 0 : index
      %c0_15 = arith.constant 0 : index
      %21 = vector.load %arg6[%c0_14, %c0_15] : memref<1x32xf32, #tpu.memory_space<vmem>>, vector<1x32xf32>
      %22 = vector.broadcast %21 : vector<1x32xf32> to vector<8x32xf32>
      %23 = arith.addf %20, %22 : vector<8x32xf32>
      %cst_16 = arith.constant 5.000000e-01 : f32
      %24 = vector.broadcast %cst_16 : f32 to vector<8x32xf32>
      %25 = arith.mulf %24, %23 : vector<8x32xf32>
      %cst_17 = arith.constant 0.707106769 : f32
      %26 = vector.broadcast %cst_17 : f32 to vector<8x32xf32>
      %27 = arith.mulf %23, %26 : vector<8x32xf32>
      %28 = math.erf %27 : vector<8x32xf32>
      %cst_18 = arith.constant 1.000000e+00 : f32
      %29 = vector.broadcast %cst_18 : f32 to vector<8x32xf32>
      %30 = arith.addf %29, %28 : vector<8x32xf32>
      %31 = arith.mulf %25, %30 : vector<8x32xf32>
      %32 = arith.mulf %19, %31 : vector<8x32xf32>
      %c0_19 = arith.constant 0 : index
      %c0_20 = arith.constant 0 : index
      %33 = vector.load %arg7[%c0_19, %c0_20] : memref<8x32xf32, #tpu.memory_space<vmem>>, vector<8x32xf32>
      tpu.vector_store %arg7[%c0_19, %c0_20], %32 {strides = array<i32>} : memref<8x32xf32, #tpu.memory_space<vmem>>, vector<8x32xf32>,
    } else {
    }
    return
  }
  func.func @transform_0(%arg0: i32, %arg1: i32, %arg2: i32) -> (i32, i32) {
    %c0_i32 = arith.constant 0 : i32
    return %arg1, %arg2 : i32, i32
  }
  func.func @transform_1(%arg0: i32, %arg1: i32, %arg2: i32) -> (i32, i32) {
    %c0_i32 = arith.constant 0 : i32
    %c0_i32_0 = arith.constant 0 : i32
    return %c0_i32, %arg0 : i32, i32
  }
  func.func @transform_2(%arg0: i32, %arg1: i32, %arg2: i32) -> (i32, i32) {
    %c0_i32 = arith.constant 0 : i32
    %c0_i32_0 = arith.constant 0 : i32
    return %c0_i32, %arg0 : i32, i32
  }
  func.func @transform_3(%arg0: i32, %arg1: i32, %arg2: i32) -> (i32, i32) {
    %c0_i32 = arith.constant 0 : i32
    %c0_i32_0 = arith.constant 0 : i32
    return %c0_i32, %arg0 : i32, i32
  }
  func.func @transform_4(%arg0: i32, %arg1: i32, %arg2: i32) -> (i32, i32) {
    %c0_i32 = arith.constant 0 : i32
    return %arg1, %arg0 : i32, i32
  }
}

</mosaic_0001>

<llo_original>
// kernel: tpu_custom_call.1
$region0: #{tpu_custom_call.1}
  #allocation0 [shape = 'u32[]', space=smem, size = 0x4, offset = 0x4, fixed_abs, tag = 'smem constant byte address 0x4 - core index']
  #allocation1 [shape = 'u32[144,128]{1,0:T(1,128)}', space=vmem, size = 0x12000, scoped, tag = 'internal scratch']
  #allocation2 [shape = 'f32[8,64]{1,0:T(8,128)}', space=vmem, size = 0x1000, scoped, tag = 'scratch operand']
  %s0 = inlined_call_operand.hbm [shape: f32[16,32], index: 0, kind: input, shape index: {}]
  %s1 = inlined_call_operand.hbm [shape: bf16[32,64], index: 1, kind: input, shape index: {}]
  %s2 = inlined_call_operand.vmem [shape: f32[1,32], index: 2, kind: input, shape index: {}]
  %s3 = inlined_call_operand.vmem [shape: f32[1,32], index: 3, kind: input, shape index: {}]
  %s4 = inlined_call_operand.hbm [shape: f32[16,32], index: 4, kind: output, shape index: {}]
  %s5 = sld [smem:[#allocation0]]
  $region65: #{tpu_custom_call.1} parent=0
    _
  %s7 = ssub.s32 1, %s5
  %s8 = scalar_select 0, %s7, %s5
  $region1: #{tpu_custom_call.1} parent=0
    #allocation3 [shape = 'u8[8192]{0}', space=vmem, size = 0x2000, scoped, tag = 'input window, operand 0']
    #allocation4 [shape = 's32[2]{0}', space=sflag, size = 0x8, scoped, tag = 'scoped memory for tpu_custom_call.1']
    #allocation5 [shape = 's32[2]{0}', space=sflag, size = 0x8, scoped, tag = 'scoped memory for tpu_custom_call.1']
    #allocation6 [shape = 'u8[8192]{0}', space=vmem, size = 0x2000, scoped, tag = 'input window, operand 1, single buffered']
    #allocation7 [shape = 's32[1]{0}', space=sflag, size = 0x4, scoped, tag = 'scoped memory for tpu_custom_call.1']
    #allocation8 [shape = 'u8[8192]{0}', space=vmem, size = 0x2000, scoped, tag = 'output window, operand 0']
    %9 = vsyncpa [#allocation4], 0
    %s10 = scalar_lea.sflag [#allocation4], 1
    %11 = vsyncpa %s10, 0
    %12 = vsyncpa [#allocation7], 0
    %13 = vsyncpa [#allocation5], 0
    %s14 = scalar_lea.sflag [#allocation5], 1
    %15 = vsyncpa %s14, 0
    loop: start=0, step=1, limit=4
    $region2: #{tpu_custom_call.1} parent=1 // loop_pre_header
      _
    $region3: #{tpu_custom_call.1} parent=1 // loop_header
      %s17 = sphi 0, %s21
      %p18 = scmp.ge.s32.totalorder %s17, 4
      %s24 = sphi 0, %s43
      %s25 = sphi 0, %s39
      %s26 = sphi 0, %s35
      %s27 = sphi 0, %s24
      %s28 = sphi 0, %s25
      %s29 = sphi 0, %s26
      %s30 = sphi 0, %s27
      %s31 = sphi 0, %s28
      %s32 = sphi 0, %s29
      %s48 = sphi 0, %s50
      %s51 = sphi 0, %s48
      %s52 = sphi 0, %s51
      %s68 = sphi 0, %s52
      %s74 = sphi 0, %s76
      %s77 = sphi 0, %s74
      %s78 = sphi 0, %s77
      %s94 = sphi 0, %s78
      %s100 = sphi 0, %s102
      %s103 = sphi 0, %s100
      %s104 = sphi 0, %s103
      %s120 = sphi 0, %s104
      %s126 = sphi 0, %s128
      %s129 = sphi 0, %s126
      %s130 = sphi 0, %s129
      %s146 = sphi 0, %s130
      %s154 = sphi 0, %s156
      %s157 = sphi 0, %s154
      %s158 = sphi 0, %s157
      %s174 = sphi 0, %s158
    $region4: #{tpu_custom_call.1} parent=1 // loop_header_branch
      %20 = sbr.rel (%p18) target = $region8
    $region5: #{tpu_custom_call.1} parent=1 // loop_body
      %s22 = ssub.s32 %s17, 1
      %s23 = ssub.s32 %s17, 2
      %s33 = sadd.s32 1, %s26
      %p34 = scmp.ge.s32.totalorder %s33, 1
      %s35 = scalar_select %p34, 0, %s33
      %s36 = sadd.s32 1, %s25
      %s37 = scalar_select %p34, %s36, %s25
      %p38 = scmp.ge.s32.totalorder %s37, 2
      %s39 = scalar_select %p38, 0, %s37
      %s40 = sadd.s32 1, %s24
      %s41 = scalar_select %p38, %s40, %s24
      %p42 = scmp.ge.s32.totalorder %s41, 1
      %s43 = scalar_select %p42, 0, %s41
      %s44 = ssub.s32 %s25, %s39
      %s45 = ssub.s32 %s26, %s35
      %s46 = sor.u32 %s44, %s45
      %p47 = scmp.eq.s32.totalorder %s46, 0
      %s49 = sadd.s32 %s48, 1
      %s50 = scalar_select %p47, %s48, %s49
      %p53 = pneg %p47
      %p54 = scmp.eq.s32.totalorder %s17, 1
      %p55 = por %p53, %p54
      %p56 = scmp.ne.s32.totalorder %s48, %s51
      %p57 = scmp.eq.s32.totalorder %s17, 0
      %p58 = por %p56, %p57
      %p59 = scmp.ne.s32.totalorder %s48, %s51
      %p60 = scmp.eq.s32.totalorder %s22, 1
      %p61 = por %p59, %p60
      %p62 = scmp.ne.s32.totalorder %s51, %s52
      %p63 = scmp.eq.s32.totalorder %s22, 0
      %p64 = por %p62, %p63
      %p65 = scmp.ne.s32.totalorder %s51, %s52
      %p66 = scmp.eq.s32.totalorder %s23, 1
      %p67 = por %p65, %p66
      %p69 = scmp.ne.s32.totalorder %s52, %s68
      %p70 = scmp.eq.s32.totalorder %s23, 0
      %p71 = por %p69, %p70
      %s72 = ssub.s32 %s24, %s43
      %p73 = scmp.eq.s32.totalorder %s72, 0
      %s75 = sadd.s32 %s74, 1
      %s76 = scalar_select %p73, %s74, %s75
      %p79 = pneg %p73
      %p80 = scmp.eq.s32.totalorder %s17, 1
      %p81 = por %p79, %p80
      %p82 = scmp.ne.s32.totalorder %s74, %s77
      %p83 = scmp.eq.s32.totalorder %s17, 0
      %p84 = por %p82, %p83
      %p85 = scmp.ne.s32.totalorder %s74, %s77
      %p86 = scmp.eq.s32.totalorder %s22, 1
      %p87 = por %p85, %p86
      %p88 = scmp.ne.s32.totalorder %s77, %s78
      %p89 = scmp.eq.s32.totalorder %s22, 0
      %p90 = por %p88, %p89
      %p91 = scmp.ne.s32.totalorder %s77, %s78
      %p92 = scmp.eq.s32.totalorder %s23, 1
      %p93 = por %p91, %p92
      %p95 = scmp.ne.s32.totalorder %s78, %s94
      %p96 = scmp.eq.s32.totalorder %s23, 0
      %p97 = por %p95, %p96
      %s98 = ssub.s32 %s24, %s43
      %p99 = scmp.eq.s32.totalorder %s98, 0
      %s101 = sadd.s32 %s100, 1
      %s102 = scalar_select %p99, %s100, %s101
      %p105 = pneg %p99
      %p106 = scmp.eq.s32.totalorder %s17, 1
      %p107 = por %p105, %p106
      %p108 = scmp.ne.s32.totalorder %s100, %s103
      %p109 = scmp.eq.s32.totalorder %s17, 0
      %p110 = por %p108, %p109
      %p111 = scmp.ne.s32.totalorder %s100, %s103
      %p112 = scmp.eq.s32.totalorder %s22, 1
      %p113 = por %p111, %p112
      %p114 = scmp.ne.s32.totalorder %s103, %s104
      %p115 = scmp.eq.s32.totalorder %s22, 0
      %p116 = por %p114, %p115
      %p117 = scmp.ne.s32.totalorder %s103, %s104
      %p118 = scmp.eq.s32.totalorder %s23, 1
      %p119 = por %p117, %p118
      %p121 = scmp.ne.s32.totalorder %s104, %s120
      %p122 = scmp.eq.s32.totalorder %s23, 0
      %p123 = por %p121, %p122
      %s124 = ssub.s32 %s24, %s43
      %p125 = scmp.eq.s32.totalorder %s124, 0
      %s127 = sadd.s32 %s126, 1
      %s128 = scalar_select %p125, %s126, %s127
      %p131 = pneg %p125
      %p132 = scmp.eq.s32.totalorder %s17, 1
      %p133 = por %p131, %p132
      %p134 = scmp.ne.s32.totalorder %s126, %s129
      %p135 = scmp.eq.s32.totalorder %s17, 0
      %p136 = por %p134, %p135
      %p137 = scmp.ne.s32.totalorder %s126, %s129
      %p138 = scmp.eq.s32.totalorder %s22, 1
      %p139 = por %p137, %p138
      %p140 = scmp.ne.s32.totalorder %s129, %s130
      %p141 = scmp.eq.s32.totalorder %s22, 0
      %p142 = por %p140, %p141
      %p143 = scmp.ne.s32.totalorder %s129, %s130
      %p144 = scmp.eq.s32.totalorder %s23, 1
      %p145 = por %p143, %p144
      %p147 = scmp.ne.s32.totalorder %s130, %s146
      %p148 = scmp.eq.s32.totalorder %s23, 0
      %p149 = por %p147, %p148
      %s150 = ssub.s32 %s25, %s39
      %s151 = ssub.s32 %s24, %s43
      %s152 = sor.u32 %s150, %s151
      %p153 = scmp.eq.s32.totalorder %s152, 0
      %s155 = sadd.s32 %s154, 1
      %s156 = scalar_select %p153, %s154, %s155
      %p159 = pneg %p153
      %p160 = scmp.eq.s32.totalorder %s17, 1
      %p161 = por %p159, %p160
      %p162 = scmp.ne.s32.totalorder %s154, %s157
      %p163 = scmp.eq.s32.totalorder %s17, 0
      %p164 = por %p162, %p163
      %p165 = scmp.ne.s32.totalorder %s154, %s157
      %p166 = scmp.eq.s32.totalorder %s22, 1
      %p167 = por %p165, %p166
      %p168 = scmp.ne.s32.totalorder %s157, %s158
      %p169 = scmp.eq.s32.totalorder %s22, 0
      %p170 = por %p168, %p169
      %p171 = scmp.ne.s32.totalorder %s157, %s158
      %p172 = scmp.eq.s32.totalorder %s23, 1
      %p173 = por %p171, %p172
      %p175 = scmp.ne.s32.totalorder %s158, %s174
      %p176 = scmp.eq.s32.totalorder %s23, 0
      %p177 = por %p175, %p176
      %p178 = scmp.le.s32.totalorder 1, %s17
      %p179 = scmp.lt.s32.totalorder %s17, 3
      %p180 = pnand %p178, %p179
      %p181 = pneg %p180
      // Predicated region
      $region9: #{tpu_custom_call.1} parent=5 // pred_check
        _
      $region10: #{tpu_custom_call.1} parent=5 // pred_check_branch
        %183 = sbr.rel (%p180) target = $region12
      $region11: #{tpu_custom_call.1} parent=5 // pred_region
        %s184 = ssub.s32 %s17, 1
        // Predicated region
        $region13: #{tpu_custom_call.1} parent=11 // pred_check
          %p185 = pneg %p90
        $region14: #{tpu_custom_call.1} parent=11 // pred_check_branch
          %187 = sbr.rel (%p185) target = $region16
        $region15: #{tpu_custom_call.1} parent=11 // pred_region
          %s189 = ssub.s32 256, 256
          %190 = vsyncadd [#allocation7], %s189
          %s191 = smul.addr %s27, 64
          %s192 = scalar_lea.hbm %s1, %s191
          %s193 = sshll.u32 [#allocation6], 4
          %s194 = int_to_ptr.vmem [resolvable:$true] %s193
          %199 = dma.hbm_to_vmem [thread:$0]  %s192, 256, %s194, [#allocation7], 64, 64, 4
        $region16: #{tpu_custom_call.1} parent=11 // pred_fallthru
          _
        // Predicated region
        $region17: #{tpu_custom_call.1} parent=11 // pred_check
          %p200 = pneg %p116
        $region18: #{tpu_custom_call.1} parent=11 // pred_check_branch
          %202 = sbr.rel (%p200) target = $region20
        $region19: #{tpu_custom_call.1} parent=11 // pred_region
          %p203 = scmp.lt.s32.totalorder %s27, 0
          %s204 = scalar_select %p203, %s27, 0
          %s205 = scalar_lea.vmem %s2, %s204
        $region20: #{tpu_custom_call.1} parent=11 // pred_fallthru
          _
        // Predicated region
        $region21: #{tpu_custom_call.1} parent=11 // pred_check
          %p206 = pneg %p142
        $region22: #{tpu_custom_call.1} parent=11 // pred_check_branch
          %208 = sbr.rel (%p206) target = $region24
        $region23: #{tpu_custom_call.1} parent=11 // pred_region
          %p209 = scmp.lt.s32.totalorder %s27, 0
          %s210 = scalar_select %p209, %s27, 0
          %s211 = scalar_lea.vmem %s3, %s210
        $region24: #{tpu_custom_call.1} parent=11 // pred_fallthru
          _
      $region12: #{tpu_custom_call.1} parent=5 // pred_fallthru
        _
      %p212 = scmp.lt.s32.totalorder %s17, 2
      // Predicated region
      $region25: #{tpu_custom_call.1} parent=5 // pred_check
        %p213 = pneg %p212
      $region26: #{tpu_custom_call.1} parent=5 // pred_check_branch
        %215 = sbr.rel (%p213) target = $region28
      $region27: #{tpu_custom_call.1} parent=5 // pred_region
        // Predicated region
        $region29: #{tpu_custom_call.1} parent=27 // pred_check
          %p216 = pneg %p58
        $region30: #{tpu_custom_call.1} parent=27 // pred_check_branch
          %218 = sbr.rel (%p216) target = $region32
        $region31: #{tpu_custom_call.1} parent=27 // pred_region
          %s219 = sand.u32 %s48, 1
          %s220 = scalar_lea.sflag [#allocation4], %s219
          %s221 = sand.u32 %s48, 1
          %s222 = smul.addr %s221, 8
          %s223 = scalar_lea.vmem [#allocation3], %s222
          %s225 = ssub.s32 128, 128
          %226 = vsyncadd %s220, %s225
          %s227 = sadd.s32 %s26, %s25
          %s228 = smul.addr %s227, 128
          %s229 = scalar_lea.hbm %s0, %s228
          %s231 = sshll.u32 %s223, 4
          %s232 = int_to_ptr.vmem [resolvable:$true] %s231
          %234 = dma.hbm_to_vmem [thread:$0]  %s229, 128, %s232, %s220
        $region32: #{tpu_custom_call.1} parent=27 // pred_fallthru
          _
      $region28: #{tpu_custom_call.1} parent=5 // pred_fallthru
        _
      %p235 = scmp.le.s32.totalorder 1, %s17
      %p236 = scmp.lt.s32.totalorder %s17, 3
      %p237 = pnand %p235, %p236
      %p238 = pneg %p237
      // Predicated region
      $region33: #{tpu_custom_call.1} parent=5 // pred_check
        _
      $region34: #{tpu_custom_call.1} parent=5 // pred_check_branch
        %240 = sbr.rel (%p237) target = $region36
      $region35: #{tpu_custom_call.1} parent=5 // pred_region
        %s241 = ssub.s32 %s17, 1
        %s242 = sand.u32 %s51, 1
        %s243 = scalar_lea.sflag [#allocation4], %s242
        %s244 = sand.u32 %s51, 1
        %s245 = smul.addr %s244, 8
        %s246 = scalar_lea.vmem [#allocation3], %s245
        // Predicated region
        $region37: #{tpu_custom_call.1} parent=35 // pred_check
          %p247 = pneg %p64
        $region38: #{tpu_custom_call.1} parent=35 // pred_check_branch
          %249 = sbr.rel (%p247) target = $region40
        $region39: #{tpu_custom_call.1} parent=35 // pred_region
          %250 = dma.done %s243, 128
        $region40: #{tpu_custom_call.1} parent=35 // pred_fallthru
          _
        // Predicated region
        $region41: #{tpu_custom_call.1} parent=35 // pred_check
          %p251 = pneg %p90
        $region42: #{tpu_custom_call.1} parent=35 // pred_check_branch
          %253 = sbr.rel (%p251) target = $region44
        $region43: #{tpu_custom_call.1} parent=35 // pred_region
          %254 = dma.done [#allocation7], 256
        $region44: #{tpu_custom_call.1} parent=35 // pred_fallthru
          _
        %s255 = sand.u32 %s51, 1
        %s256 = scalar_lea.sflag [#allocation4], %s255
        %s257 = sand.u32 %s51, 1
        %s258 = smul.addr %s257, 8
        %s259 = scalar_lea.vmem [#allocation3], %s258
        %p260 = pneg %p64
        %p261 = pneg %p61
        %p262 = pneg %p90
        %p263 = pneg %p87
        %p264 = scmp.lt.s32.totalorder %s27, 0
        %s265 = scalar_select %p264, %s27, 0
        %s266 = scalar_lea.vmem %s2, %s265
        %p267 = pneg %p116
        %p268 = pneg %p113
        %p269 = scmp.lt.s32.totalorder %s27, 0
        %s270 = scalar_select %p269, %s27, 0
        %s271 = scalar_lea.vmem %s3, %s270
        %p272 = pneg %p142
        %p273 = pneg %p139
        %p274 = pneg %p170
        %p275 = pneg %p167
        %s276 = sand.u32 %s157, 1
        %s277 = scalar_lea.sflag [#allocation5], %s276
        %s278 = sand.u32 %s157, 1
        %s279 = smul.addr %s278, 8
        %s280 = scalar_lea.vmem [#allocation8], %s279
        %p281 = scmp.lt.s32.totalorder %s27, 0
        %s282 = scalar_select %p281, %s27, 0
        %s283 = scalar_lea.vmem %s2, %s282
        %p284 = scmp.lt.s32.totalorder %s27, 0
        %s285 = scalar_select %p284, %s27, 0
        %s286 = scalar_lea.vmem %s3, %s285
        %p288 = scmp.eq.s32.totalorder %s29, 0
        // Predicated region
        $region45: #{tpu_custom_call.1} parent=35 // pred_check
          %p289 = pneg %p288
        $region46: #{tpu_custom_call.1} parent=35 // pred_check_branch
          %291 = sbr.rel (%p289) target = $region48
        $region47: #{tpu_custom_call.1} parent=35 // pred_region
          %vm292 = vcmask 523264
          %293 = vst.msk [vmem:[#allocation2] sm:$0xff] %vm292, 0.0
        $region48: #{tpu_custom_call.1} parent=35 // pred_fallthru
          _
        %v294 = vld [vmem:[%s246] sm:$0xff]
        %v295 = vpack.c.bf16 %v294, %v294
        %s296 = smul.u32 %s29, 32
        %s297 = sshra.s32 %s296, 3
        %s298 = sand.u32 %s296, 7
        %s299 = smul.addr %s297, 4
        %s300 = scalar_lea.vmem [#allocation6], %s299
        %v301 = vld [vmem:[%s300] sm:$0xf]
        %v302 = vld [vmem:[%s300 + $0x4] sm:$0xf]
        %v303 = vld [vmem:[%s300 + $0x8] sm:$0xf]
        %v304 = vld [vmem:[%s300 + $0xc] sm:$0xf]
        %v305 = vld [vmem:[#allocation2] sm:$0xff]
        %v310 = vunpack.c.l.b16 %v301
        %v311 = vunpack.c.l.b16 %v302
        %v312 = vunpack.c.l.b16 %v303
        %v313 = vunpack.c.l.b16 %v304
        %v314 = vpack.c.b16 %v311, %v310
        %v315 = vpack.c.b16 %v313, %v312
        %vm318 = vcmask 261120
        %v320 = vsel %vm318, %v295, 0
        %322 = vmatprep.subr.bf16.mxu0 0
        %323 = vmatpush1.bf16.msra.mxu0 0
        %324 = vmatprep.subr.bf16.mxu0 0
        %325 = vmatpush1.bf16.msra.mxu0 0
        %326 = vmatprep.subr.bf16.mxu0 0
        %327 = vmatpush1.bf16.msra.mxu0 0
        %328 = vmatprep.subr.bf16.mxu0 0
        %329 = vmatpush1.bf16.msra.mxu0 0
        %330 = vmatprep.subr.bf16.mxu0 0
        %331 = vmatpush1.bf16.msra.mxu0 0
        %332 = vmatprep.subr.bf16.mxu0 0
        %333 = vmatpush1.bf16.msra.mxu0 0
        %334 = vmatprep.subr.bf16.mxu0 0
        %335 = vmatpush1.bf16.msra.mxu0 %v315
        %336 = vmatprep.subr.bf16.mxu0 0
        %337 = vmatpush1.bf16.msra.mxu0 %v314
        %338 = vmatprep.subr.bf16.mxu0 0
        %339 = vmatpush2.bf16.msra.mxu0 0
        %340 = vmatprep.subr.bf16.mxu0 0
        %341 = vmatpush2.bf16.msra.mxu0 0
        %342 = vmatprep.subr.bf16.mxu0 0
        %343 = vmatpush2.bf16.msra.mxu0 0
        %344 = vmatprep.subr.bf16.mxu0 0
        %345 = vmatpush2.bf16.msra.mxu0 0
        %346 = vmatprep.subr.bf16.mxu0 0
        %347 = vmatpush2.bf16.msra.mxu0 0
        %348 = vmatprep.subr.bf16.mxu0 0
        %349 = vmatpush2.bf16.msra.mxu0 0
        %350 = vmatprep.subr.bf16.mxu0 0
        %351 = vmatpush2.bf16.msra.mxu0 0
        %352 = vmatprep.subr.bf16.mxu0 0
        %353 = vmatpush2.bf16.msra.mxu0 0
        %354 = vmatprep.mubr.bf16.mxu0 0
        %355 = vmatmul.mubr.bf16.gmra.mxu0 %v320
        %v356 = vpop.f32.mrf.mxu0
        %v357 = vadd.f32 0.0, %v356
        %v358 = vpop.f32.mrf.mxu0
        %v359 = vpop.f32.mrf.mxu0
        %v360 = vpop.f32.mrf.mxu0
        %361 = vdwg.mxu0
        %v362 = vadd.f32 %v305, %v357
        %vm363 = vcmask 523264
        %364 = vst.msk [vmem:[#allocation2] sm:$0xff] %vm363, %v362
        // Predicated region
        $region49: #{tpu_custom_call.1} parent=35 // pred_check
          %p365 = pneg %p288
        $region50: #{tpu_custom_call.1} parent=35 // pred_check_branch
          %367 = sbr.rel (%p365) target = $region52
        $region51: #{tpu_custom_call.1} parent=35 // pred_region
          %v368 = vld [vmem:[#allocation2] sm:$0xff]
          %v369 = vld [vmem:[%s283] sm:$0x1]
          %v371 = vlaneseq
          %v372 = vshrl.u32 %v371, 7
          %v373 = vsub.s32 0, %v372
          %v374 = vrot.slane %v369, %v373
          %v376 = vadd.f32 %v368, %v374
          %v377 = vld [vmem:[%s286] sm:$0x1]
          %v379 = vlaneseq
          %v380 = vshrl.u32 %v379, 7
          %v381 = vsub.s32 0, %v380
          %v382 = vrot.slane %v377, %v381
          %383 = vrot.lane.b32.xlu0 %v382, 32
          %v384 = vpop.permute.xlu0 %383
          %v386 = vadd.f32 %v368, %v384
          %v387 = vmul.f32 %v386, 0.5
          %v388 = vmul.f32 %v386, 0.70710677
          %v389 = verf.f32.pop %v388
          %v390 = vadd.f32 %v389, 1.0
          %v391 = vmul.f32 %v387, %v390
          %393 = vrot.lane.b32.xlu0 %v391, 96
          %v394 = vpop.permute.xlu0 %393
          %v396 = vmul.f32 %v376, %v394
          %397 = vst.msk [vmem:[%s280] sm:$0xff] %vm318, %v396
        $region52: #{tpu_custom_call.1} parent=35 // pred_fallthru
          _
        %s398 = sand.u32 %s157, 1
        %s399 = scalar_lea.sflag [#allocation5], %s398
        %s400 = sand.u32 %s157, 1
        %s401 = smul.addr %s400, 8
        %s402 = scalar_lea.vmem [#allocation8], %s401
        // Predicated region
        $region53: #{tpu_custom_call.1} parent=35 // pred_check
          %p403 = pneg %p167
        $region54: #{tpu_custom_call.1} parent=35 // pred_check_branch
          %405 = sbr.rel (%p403) target = $region56
        $region55: #{tpu_custom_call.1} parent=35 // pred_region
          %s407 = ssub.s32 128, 128
          %408 = vsyncadd %s399, %s407
          %s409 = sadd.s32 %s27, %s28
          %s410 = smul.addr %s409, 128
          %s411 = scalar_lea.hbm %s4, %s410
          %s413 = sshll.u32 %s402, 4
          %s414 = int_to_ptr.vmem [resolvable:$true] %s413
          %416 = dma.vmem_to_hbm [thread:$0]  %s414, 128, %s411, %s399
        $region56: #{tpu_custom_call.1} parent=35 // pred_fallthru
          _
      $region36: #{tpu_custom_call.1} parent=5 // pred_fallthru
        _
      %p417 = scmp.le.s32.totalorder 2, %s17
      // Predicated region
      $region57: #{tpu_custom_call.1} parent=5 // pred_check
        %p418 = pneg %p417
      $region58: #{tpu_custom_call.1} parent=5 // pred_check_branch
        %420 = sbr.rel (%p418) target = $region60
      $region59: #{tpu_custom_call.1} parent=5 // pred_region
        %s421 = ssub.s32 %s17, 2
        // Predicated region
        $region61: #{tpu_custom_call.1} parent=59 // pred_check
          %p422 = pneg %p173
        $region62: #{tpu_custom_call.1} parent=59 // pred_check_branch
          %424 = sbr.rel (%p422) target = $region64
        $region63: #{tpu_custom_call.1} parent=59 // pred_region
          %s425 = sand.u32 %s158, 1
          %s426 = scalar_lea.sflag [#allocation5], %s425
          %s427 = sand.u32 %s158, 1
          %s428 = smul.addr %s427, 8
          %s429 = scalar_lea.vmem [#allocation8], %s428
          %430 = dma.done %s426, 128
        $region64: #{tpu_custom_call.1} parent=59 // pred_fallthru
          _
      $region60: #{tpu_custom_call.1} parent=5 // pred_fallthru
        _
    $region6: #{tpu_custom_call.1} parent=1 // loop_footer
      %s21 = sadd.s32 1, %s17
    $region7: #{tpu_custom_call.1} parent=1 // loop_footer_branch
      %16 = sbr.rel target = $region3
    $region8: #{tpu_custom_call.1} parent=1 // loop_exit
      _
    %431 = vsyncpa [#allocation4], 1
    %s432 = scalar_lea.sflag [#allocation4], 1
    %433 = vsyncpa %s432, 1
    %434 = vsyncpa [#allocation7], 1
    %435 = vsyncpa [#allocation5], 1
    %s436 = scalar_lea.sflag [#allocation5], 1
    %437 = vsyncpa %s436, 1

</llo_original>
